<compile_context>
chip_gen: v5e
topology: v5e:2x2
jax: 0.10.0
libtpu: 0.0.40
codegen_flags: <defaults>
</compile_context>

<pallas_src>
import jax
import jax.numpy as jnp
from jax.experimental import pallas as pl
from jax.experimental.pallas import tpu as pltpu


def _tpu_generation():
    """Best-effort (vmem_capacity_bytes, num_tensorcores, is_v7) query."""
    kind = ""
    try:
        kind = (jax.devices()[0].device_kind or "").lower()
    except Exception:
        pass
    is_v7 = "v7" in kind
    vmem = (64 << 20) if is_v7 else (128 << 20)
    cores = 2 if is_v7 else 1
    try:
        info = pltpu.get_tpu_info()
        v = getattr(info, "vmem_capacity_bytes", None)
        if v:
            vmem = int(v)
        c = getattr(info, "num_cores", None) or getattr(info, "tensorcore_count", None)
        if c:
            cores = int(c)
    except Exception:
        pass
    return vmem, cores, is_v7


def affine_mse(out, label, A):
    """out, label: (B, D); A: (D, D). Returns scalar f32 loss = 1.1 * MSE."""
    B, D = out.shape
    assert label.shape == (B, D)
    assert A.shape == (D, D)

    itemsize = jnp.dtype(out.dtype).itemsize
    a_bytes = D * D * jnp.dtype(A.dtype).itemsize

    vmem_phys, num_cores, is_v7 = _tpu_generation()

    # --- per-generation tile / scoped-VMEM targets (never request the whole
    # physical VMEM; leave headroom for compiler-internal scratch).
    if is_v7:
        vmem_cap = min(vmem_phys, 64 << 20) - (8 << 20)      # ~56 MiB usable
        target_block_bytes = 4 << 20
    else:
        vmem_cap = min(vmem_phys, 128 << 20) - (16 << 20)    # ~112 MiB usable
        target_block_bytes = 8 << 20

    # Sublane multiple for the input dtype (sub-32-bit packs along sublanes).
    sub = max(8, 32 // itemsize)          # 8: f32, 16: bf16, 32: int8/fp8

    # Per-row VMEM cost of the pipeline: 2 input streams x 2 buffers (input
    # dtype) plus one f32 temp row for the matmul result / squared diff.
    per_row = 4 * D * itemsize + 4 * D
    headroom = 4 << 20
    # A's block index is constant, but the default pipeline double-buffers it.
    # TODO(synk): for very large D, single-buffer A (pipeline_mode=pl.Buffered(1))
    # and/or keep a bf16 copy of A (with preferred_element_type=f32), and tile
    # A over a K grid axis once the problem becomes MXU-bound.
    stream_budget = vmem_cap - 2 * a_bytes - headroom
    tb_from_vmem = max(sub, stream_budget // per_row)
    tb = min(target_block_bytes // max(1, D * itemsize), tb_from_vmem)
    tb = max(sub, (tb // sub) * sub)
    # Don't exceed the batch (round DOWN so the last block overlaps the array
    # whenever B >= sub; the in-kernel mask handles the ragged remainder).
    tb = min(tb, max(sub, (B // sub) * sub))

    n_tiles = pl.cdiv(B, tb)
    # Split the parallel axis only when there are >= 2 TensorCores to feed.
    n_outer = 2 if (num_cores >= 2 and n_tiles >= 2) else 1
    n_inner = pl.cdiv(n_tiles, n_outer)

    # Ragged tail / dead-tile handling is done in-kernel (no jnp.pad copies).
    needs_mask = (n_outer * n_inner * tb) != B
    last_block = n_tiles - 1

    def batch_index_map(i, j):
        t = i * n_inner + j
        if n_outer * n_inner > n_tiles:
            # Dead tiles (t >= n_tiles) re-read the last valid block; their
            # rows are fully masked out in the kernel (row_id >= B).
            t = jnp.minimum(t, last_block)
        return (t, 0)

    def kernel(out_ref, label_ref, a_ref, psum_ref):
        j = pl.program_id(1)

        @pl.when(j == 0)
        def _init():
            psum_ref[...] = jnp.zeros_like(psum_ref)

        # MXU matmul in the input dtype (bf16 fed natively), f32 accumulation.
        transformed = jnp.dot(
            label_ref[...], a_ref[...], preferred_element_type=jnp.float32
        )
        diff = out_ref[...].astype(jnp.float32) - transformed
        dsq = diff * diff
        if needs_mask:
            # Zero contributions from rows past the true batch size B
            # (ragged last tile and/or the dead tile of the outer split).
            t = pl.program_id(0) * n_inner + j
            row_ids = t * tb + jax.lax.broadcasted_iota(jnp.int32, (tb, D), 0)
            dsq = jnp.where(row_ids < B, dsq, 0.0)
        # One partial sum per outer (parallel) grid index, resident across j.
        psum_ref[...] += jnp.sum(dsq)

    needed = 4 * tb * D * itemsize + 2 * a_bytes + tb * D * 4 + headroom
    vmem_limit = int(min(max(needed, 32 << 20), vmem_cap + headroom))

    psums = pl.pallas_call(
        kernel,
        out_shape=jax.ShapeDtypeStruct((n_outer, 1, 1), jnp.float32),
        grid=(n_outer, n_inner),
        in_specs=[
            pl.BlockSpec((tb, D), batch_index_map),
            pl.BlockSpec((tb, D), batch_index_map),
            pl.BlockSpec((D, D), lambda i, j: (0, 0)),  # A stays VMEM-resident
        ],
        out_specs=pl.BlockSpec((1, 1, 1), lambda i, j: (i, 0, 0)),
        compiler_params=pltpu.CompilerParams(
            dimension_semantics=("parallel", "arbitrary"),
            vmem_limit_bytes=vmem_limit,
        ),
    )(out, label, A)

    # Tiny epilogue: cross-core sum, global mean over the TRUE element count,
    # and the (1 + 0.1) factor applied exactly once.
    return jnp.sum(psums) * (1.1 / (B * D))


if __name__ == "__main__":
    key = jax.random.PRNGKey(0)
    k_out, k_label = jax.random.split(key)

    # Small shapes consistent with the module: batch=8, label_dim=32.
    B, D = 8, 32
    out = jax.random.normal(k_out, (B, D), dtype=jnp.float32)
    label = jax.random.normal(k_label, (B, D), dtype=jnp.float32)
    A = jnp.eye(D, dtype=jnp.float32)  # __init__: A = eye(label_dim)

    loss = affine_mse(out, label, A)
    jax.block_until_ready(loss)

    transformed = label @ A
    ref = jnp.mean((out - transformed) ** 2) * 1.1
    assert jnp.allclose(loss, ref, rtol=1e-5, atol=1e-6), (loss, ref)

    # Second check exercising the in-kernel ragged-tail mask (B not a multiple
    # of the tile size), replacing the old wrapper-side jnp.pad path.
    B2 = 137
    out2 = jax.random.normal(jax.random.PRNGKey(1), (B2, D), dtype=jnp.float32)
    label2 = jax.random.normal(jax.random.PRNGKey(2), (B2, D), dtype=jnp.float32)
    loss2 = affine_mse(out2, label2, A)
    jax.block_until_ready(loss2)
    ref2 = jnp.mean((out2 - label2 @ A) ** 2) * 1.1
    assert jnp.allclose(loss2, ref2, rtol=1e-5, atol=1e-6), (loss2, ref2)

    print("KERNEL_OK")
</pallas_src>

<mosaic_0001>
module attributes {stable_mosaic.version = 11 : i64} {
  func.func @kernel(%arg0: i32, %arg1: i32, %arg2: memref<8x32xf32, #tpu.memory_space<vmem>>, %arg3: memref<8x32xf32, #tpu.memory_space<vmem>>, %arg4: memref<32x32xf32, #tpu.memory_space<vmem>>, %arg5: memref<1x1x1xf32, #tpu.memory_space<vmem>>) attributes {dimension_semantics = [#tpu.dimension_semantics<parallel>, #tpu.dimension_semantics<arbitrary>], iteration_bounds = array<i64: 1, 1>, scalar_prefetch = 0 : i64, scratch_operands = 0 : i64, tpu.core_type = #tpu.core_type<tc>, window_params = [{transform_indices = @transform_0, window_bounds = array<i64: 8, 32>}, {transform_indices = @transform_1, window_bounds = array<i64: 8, 32>}, {pipeline_mode = #tpu.pipeline_mode<synchronous>, transform_indices = @transform_2, window_bounds = array<i64: 32, 32>}, {transform_indices = @transform_3, window_bounds = array<i64: 1, 1, 1>}]} {
    %c0_i32 = arith.constant 0 : i32
    %0 = arith.cmpi eq, %arg1, %c0_i32 : i32
    %1 = arith.extui %0 : i1 to i32
    %c0_i32_0 = arith.constant 0 : i32
    %2 = arith.cmpi ne, %1, %c0_i32_0 : i32
    scf.if %2 {
      %cst_13 = arith.constant 0.000000e+00 : f32
      %17 = vector.broadcast %cst_13 : f32 to vector<1x1x1xf32>
      %c0_14 = arith.constant 0 : index
      %c0_15 = arith.constant 0 : index
      %c0_16 = arith.constant 0 : index
      %18 = vector.load %arg5[%c0_14, %c0_15, %c0_16] : memref<1x1x1xf32, #tpu.memory_space<vmem>>, vector<1x1x1xf32>
      tpu.vector_store %arg5[%c0_14, %c0_15, %c0_16], %17 {strides = array<i32>} : memref<1x1x1xf32, #tpu.memory_space<vmem>>, vector<1x1x1xf32>,
    } else {
    }
    %c0 = arith.constant 0 : index
    %c0_1 = arith.constant 0 : index
    %3 = vector.load %arg3[%c0, %c0_1] : memref<8x32xf32, #tpu.memory_space<vmem>>, vector<8x32xf32>
    %c0_2 = arith.constant 0 : index
    %c0_3 = arith.constant 0 : index
    %4 = vector.load %arg4[%c0_2, %c0_3] : memref<32x32xf32, #tpu.memory_space<vmem>>, vector<32x32xf32>
    %cst = arith.constant dense<0.000000e+00> : vector<8x32xf32>
    %5 = tpu.matmul %3, %4, %cst {dimension_numbers = #tpu.dot_dimension_numbers<[1], [0], [0], [1], [0, 0, 1, 1], [], []>} : vector<8x32xf32>, vector<32x32xf32>, vector<8x32xf32> -> vector<8x32xf32>
    %c0_4 = arith.constant 0 : index
    %c0_5 = arith.constant 0 : index
    %6 = vector.load %arg2[%c0_4, %c0_5] : memref<8x32xf32, #tpu.memory_space<vmem>>, vector<8x32xf32>
    %7 = arith.subf %6, %5 : vector<8x32xf32>
    %8 = arith.mulf %7, %7 : vector<8x32xf32>
    %c0_6 = arith.constant 0 : index
    %c0_7 = arith.constant 0 : index
    %c0_8 = arith.constant 0 : index
    %9 = vector.load %arg5[%c0_6, %c0_7, %c0_8] : memref<1x1x1xf32, #tpu.memory_space<vmem>>, vector<1x1x1xf32>
    %10 = vector.shape_cast %8 : vector<8x32xf32> to vector<1x8x32xf32>
    %cst_9 = arith.constant dense<0.000000e+00> : vector<1xf32>
    %11 = vector.multi_reduction <add>, %10, %cst_9 [1, 2] : vector<1x8x32xf32> to vector<1xf32>
    %12 = vector.shape_cast %11 : vector<1xf32> to vector<1x1x1xf32>
    %13 = vector.extract %12[0, 0, 0] : f32 from vector<1x1x1xf32>
    %14 = vector.broadcast %13 : f32 to vector<1x1x1xf32>
    %15 = arith.addf %9, %14 : vector<1x1x1xf32>
    %c0_10 = arith.constant 0 : index
    %c0_11 = arith.constant 0 : index
    %c0_12 = arith.constant 0 : index
    %16 = vector.load %arg5[%c0_10, %c0_11, %c0_12] : memref<1x1x1xf32, #tpu.memory_space<vmem>>, vector<1x1x1xf32>
    tpu.vector_store %arg5[%c0_10, %c0_11, %c0_12], %15 {strides = array<i32>} : memref<1x1x1xf32, #tpu.memory_space<vmem>>, vector<1x1x1xf32>,
    return
  }
  func.func @transform_0(%arg0: i32, %arg1: i32) -> (i32, i32) {
    %c1_i32 = arith.constant 1 : i32
    %0 = arith.muli %arg0, %c1_i32 : i32
    %1 = arith.addi %0, %arg1 : i32
    %c0_i32 = arith.constant 0 : i32
    %c0_i32_0 = arith.constant 0 : i32
    return %1, %c0_i32 : i32, i32
  }
  func.func @transform_1(%arg0: i32, %arg1: i32) -> (i32, i32) {
    %c1_i32 = arith.constant 1 : i32
    %0 = arith.muli %arg0, %c1_i32 : i32
    %1 = arith.addi %0, %arg1 : i32
    %c0_i32 = arith.constant 0 : i32
    %c0_i32_0 = arith.constant 0 : i32
    return %1, %c0_i32 : i32, i32
  }
  func.func @transform_2(%arg0: i32, %arg1: i32) -> (i32, i32) {
    %c0_i32 = arith.constant 0 : i32
    %c0_i32_0 = arith.constant 0 : i32
    %c0_i32_1 = arith.constant 0 : i32
    return %c0_i32, %c0_i32_0 : i32, i32
  }
  func.func @transform_3(%arg0: i32, %arg1: i32) -> (i32, i32, i32) {
    %c0_i32 = arith.constant 0 : i32
    %c0_i32_0 = arith.constant 0 : i32
    %c0_i32_1 = arith.constant 0 : i32
    return %arg0, %c0_i32, %c0_i32_0 : i32, i32, i32
  }
}

</mosaic_0001>

<llo_original>
// kernel: tpu_custom_call.1
$region0: #{tpu_custom_call.1}
  #allocation0 [shape = 'u32[]', space=smem, size = 0x4, offset = 0x4, fixed_abs, tag = 'smem constant byte address 0x4 - core index']
  #allocation1 [shape = 'u32[72,128]{1,0:T(1,128)}', space=vmem, size = 0x9000, scoped, tag = 'internal scratch']
  %s0 = inlined_call_operand.hbm [shape: f32[8,32], index: 0, kind: input, shape index: {}]
  %s1 = inlined_call_operand.hbm [shape: f32[8,32], index: 1, kind: input, shape index: {}]
  %s2 = inlined_call_operand.hbm [shape: f32[32,32], index: 2, kind: input, shape index: {}]
  %s3 = inlined_call_operand.hbm [shape: f32[1,1,1], index: 3, kind: output, shape index: {}]
  %s4 = sld [smem:[#allocation0]]
  $region38: #{tpu_custom_call.1} parent=0
    _
  %s6 = ssub.s32 1, %s4
  %s7 = scalar_select 0, %s6, %s4
  $region1: #{tpu_custom_call.1} parent=0
    #allocation2 [shape = 'u8[4096]{0}', space=vmem, size = 0x1000, scoped, tag = 'input window, operand 0, single buffered']
    #allocation3 [shape = 's32[1]{0}', space=sflag, size = 0x4, scoped, tag = 'scoped memory for tpu_custom_call.1']
    #allocation4 [shape = 's32[1]{0}', space=sflag, size = 0x4, scoped, tag = 'scoped memory for tpu_custom_call.1']
    #allocation5 [shape = 'u8[4096]{0}', space=vmem, size = 0x1000, scoped, tag = 'input window, operand 1, single buffered']
    #allocation6 [shape = 's32[1]{0}', space=sflag, size = 0x4, scoped, tag = 'scoped memory for tpu_custom_call.1']
    #allocation7 [shape = 'u8[16384]{0}', space=vmem, size = 0x4000, scoped, tag = 'input window, operand 2, single buffered']
    #allocation8 [shape = 'u8[512]{0}', space=vmem, size = 0x400, scoped, tag = 'output window, operand 0, single buffered']
    %8 = vsyncpa [#allocation3], 0
    %9 = vsyncpa [#allocation6], 0
    %10 = vsyncpa [#allocation4], 0
    // Predicated region
    $region2: #{tpu_custom_call.1} parent=1 // pred_check
      _
    $region3: #{tpu_custom_call.1} parent=1 // pred_check_branch
      %12 = sbr.rel (0) target = $region5
    $region4: #{tpu_custom_call.1} parent=1 // pred_region
      %s13 = sadd.s32 0, 0
      %15 = vsyncadd [#allocation3], 0
      %s16 = smul.addr %s13, 8
      %s17 = scalar_lea.hbm %s0, %s16
      %s19 = sshll.u32 %s17, 4
      %s20 = int_to_ptr.hbm [resolvable:$true] %s19
      %s21 = sshll.u32 [#allocation2], 4
      %s22 = int_to_ptr.vmem [resolvable:$true] %s21
      %24 = dma.hbm_to_vmem [thread:$0]  %s20, 128, %s22, [#allocation3]
    $region5: #{tpu_custom_call.1} parent=1 // pred_fallthru
      _
    // Predicated region
    $region6: #{tpu_custom_call.1} parent=1 // pred_check
      _
    $region7: #{tpu_custom_call.1} parent=1 // pred_check_branch
      %26 = sbr.rel (0) target = $region9
    $region8: #{tpu_custom_call.1} parent=1 // pred_region
      %s27 = sadd.s32 0, 0
      %29 = vsyncadd [#allocation6], 0
      %s30 = smul.addr %s27, 8
      %s31 = scalar_lea.hbm %s1, %s30
      %s33 = sshll.u32 %s31, 4
      %s34 = int_to_ptr.hbm [resolvable:$true] %s33
      %s35 = sshll.u32 [#allocation5], 4
      %s36 = int_to_ptr.vmem [resolvable:$true] %s35
      %38 = dma.hbm_to_vmem [thread:$0]  %s34, 128, %s36, [#allocation6]
    $region9: #{tpu_custom_call.1} parent=1 // pred_fallthru
      _
    // Predicated region
    $region10: #{tpu_custom_call.1} parent=1 // pred_check
      _
    $region11: #{tpu_custom_call.1} parent=1 // pred_check_branch
      %40 = sbr.rel (0) target = $region13
    $region12: #{tpu_custom_call.1} parent=1 // pred_region
      %42 = vsyncadd [#allocation6], 0
      %s43 = sshll.u32 %s2, 4
      %s44 = int_to_ptr.hbm [resolvable:$true] %s43
      %s45 = sshll.u32 [#allocation7], 4
      %s46 = int_to_ptr.vmem [resolvable:$true] %s45
      %51 = dma.hbm_to_vmem [thread:$0]  %s44, 512, %s46, [#allocation6], 128, 128, 8
    $region13: #{tpu_custom_call.1} parent=1 // pred_fallthru
      _
    // Predicated region
    $region14: #{tpu_custom_call.1} parent=1 // pred_check
      _
    $region15: #{tpu_custom_call.1} parent=1 // pred_check_branch
      %53 = sbr.rel (0) target = $region17
    $region16: #{tpu_custom_call.1} parent=1 // pred_region
      %55 = dma.done [#allocation3], 128
    $region17: #{tpu_custom_call.1} parent=1 // pred_fallthru
      _
    // Predicated region
    $region18: #{tpu_custom_call.1} parent=1 // pred_check
      _
    $region19: #{tpu_custom_call.1} parent=1 // pred_check_branch
      %57 = sbr.rel (0) target = $region21
    $region20: #{tpu_custom_call.1} parent=1 // pred_region
      %59 = dma.done [#allocation6], 128
    $region21: #{tpu_custom_call.1} parent=1 // pred_fallthru
      _
    // Predicated region
    $region22: #{tpu_custom_call.1} parent=1 // pred_check
      _
    $region23: #{tpu_custom_call.1} parent=1 // pred_check_branch
      %61 = sbr.rel (0) target = $region25
    $region24: #{tpu_custom_call.1} parent=1 // pred_region
      %63 = dma.done [#allocation6], 512
    $region25: #{tpu_custom_call.1} parent=1 // pred_fallthru
      _
    %s64 = sadd.s32 0, 0
    %s65 = sadd.s32 0, 0
    %p66 = scmp.eq.s32.totalorder 0, 0
    // Predicated region
    $region26: #{tpu_custom_call.1} parent=1 // pred_check
      %p67 = pneg %p66
    $region27: #{tpu_custom_call.1} parent=1 // pred_check_branch
      %69 = sbr.rel (%p67) target = $region29
    $region28: #{tpu_custom_call.1} parent=1 // pred_region
      %vm70 = vcmask 0
      %71 = vst.msk [vmem:[#allocation8] sm:$0x1] %vm70, 0.0
    $region29: #{tpu_custom_call.1} parent=1 // pred_fallthru
      _
    %v72 = vld [vmem:[#allocation5] sm:$0xff]
    %v73 = vld [vmem:[#allocation7] sm:$0xff]
    %v74 = vld [vmem:[#allocation7 + $0x8] sm:$0xff]
    %v75 = vld [vmem:[#allocation7 + $0x10] sm:$0xff]
    %v76 = vld [vmem:[#allocation7 + $0x18] sm:$0xff]
    %vm77 = vcmask 261120
    %v79 = vsel %vm77, %v72, 0
    %81 = vmatpush.msra.mxu0 0.0
    %82 = vmatpush.msra.mxu0 0.0
    %83 = vmatpush.msra.mxu0 0.0
    %84 = vmatpush.msra.mxu0 0.0
    %85 = vmatpush.msra.mxu0 0.0
    %86 = vmatpush.msra.mxu0 0.0
    %87 = vmatpush.msra.mxu0 0.0
    %88 = vmatpush.msra.mxu0 0.0
    %89 = vmatpush.msra.mxu0 0.0
    %90 = vmatpush.msra.mxu0 0.0
    %91 = vmatpush.msra.mxu0 0.0
    %92 = vmatpush.msra.mxu0 0.0
    %93 = vmatpush.msra.mxu0 %v76
    %94 = vmatpush.msra.mxu0 %v75
    %95 = vmatpush.msra.mxu0 %v74
    %96 = vmatpush.msra.mxu0 %v73
    %97 = vmatmul.f32.gmra.mxu0 %v79
    %v98 = vpop.f32.mrf.mxu0
    %v99 = vadd.f32 0.0, %v98
    %100 = vdwg.mxu0
    %v101 = vld [vmem:[#allocation2] sm:$0xff]
    %v102 = vsub.f32 %v101, %v99
    %v103 = vmul.f32 %v102, %v102
    %v104 = vld [vmem:[#allocation8] sm:$0x1]
    %v105 = vsel %vm77, %v103, 0.0
    %106 = vadd.xlane.f32.xlu0 %v105
    %v107 = vpop.xlane.xlu0 %106
    %v108 = vrot.slane %v107, 4
    %v109 = vadd.f32 %v107, %v108
    %v110 = vrot.slane %v109, 2
    %v111 = vadd.f32 %v109, %v110
    %v112 = vrot.slane %v111, 1
    %v113 = vadd.f32 %v111, %v112
    %s114 = vtos %v113
    %v115 = vstv %s114
    %v116 = vadd.f32 %v104, %v115
    %vm117 = vcmask 0
    %118 = vst.msk [vmem:[#allocation8] sm:$0x1] %vm117, %v116
    // Predicated region
    $region30: #{tpu_custom_call.1} parent=1 // pred_check
      _
    $region31: #{tpu_custom_call.1} parent=1 // pred_check_branch
      %120 = sbr.rel (0) target = $region33
    $region32: #{tpu_custom_call.1} parent=1 // pred_region
      %122 = vsyncadd [#allocation4], 0
      %s124 = sshll.u32 [#allocation8], 4
      %s125 = int_to_ptr.vmem [resolvable:$true] %s124
      %s126 = sshll.u32 %s3, 4
      %s127 = int_to_ptr.hbm [resolvable:$true] %s126
      %129 = dma.vmem_to_hbm [thread:$0]  %s125, 16, %s127, [#allocation4]
    $region33: #{tpu_custom_call.1} parent=1 // pred_fallthru
      _
    // Predicated region
    $region34: #{tpu_custom_call.1} parent=1 // pred_check
      _
    $region35: #{tpu_custom_call.1} parent=1 // pred_check_branch
      %131 = sbr.rel (0) target = $region37
    $region36: #{tpu_custom_call.1} parent=1 // pred_region
      %133 = dma.done [#allocation4], 16
    $region37: #{tpu_custom_call.1} parent=1 // pred_fallthru
      _
    %134 = vsyncpa [#allocation3], 1
    %135 = vsyncpa [#allocation6], 1
    %136 = vsyncpa [#allocation4], 1

</llo_original>
